<compile_context>
chip_gen: v5e
topology: v5e:2x2
jax: 0.10.0
libtpu: 0.0.40
codegen_flags: <defaults>
</compile_context>

<pallas_src>
import jax
import jax.numpy as jnp
from jax.experimental import pallas as pl
from jax.experimental.pallas import tpu as pltpu


def _spatial_attention_kernel(x_ref, w_ref, b_ref, o_ref):
    """One grid step over TB batch rows.

    x_ref: (TB, C, L)    VMEM   input tile (native dtype)
    w_ref: (2, 7)        SMEM   conv1d weight (out-channel dim squeezed)
    b_ref: (1,)          SMEM   conv1d bias
    o_ref: (TB, L_out)   VMEM   sigmoid(conv); columns >= L are discarded
    """
    xv = x_ref[...]                               # no full-tile f32 copy
    tb, _, l = xv.shape
    l_out = o_ref.shape[-1]                       # stored width, 128-multiple
    # Working width: lane-dense with >= 3 zero columns of right slack so the
    # rolled conv taps never need edge masks (only in-kernel temporaries).
    l_work = l_out if (l_out - l) >= 3 else l_out + 128

    # Channel reductions: mean accumulates in f32 (matches the f32 reference
    # even for bf16 inputs); max stays in native dtype, widened once.
    avg = jnp.mean(xv, axis=1, dtype=jnp.float32)           # (TB, L)
    mx = jnp.max(xv, axis=1).astype(jnp.float32)            # (TB, L)

    # Right-pad to L_work.  The zero tail is exactly the conv's zero padding;
    # rolled-in wraparound values land either in that zero tail (left edge) or
    # in discarded columns >= L (right edge), so no boundary masks are needed.
    zpad = jnp.zeros((tb, l_work - l), jnp.float32)
    avg_p = jnp.concatenate([avg, zpad], axis=-1)            # (TB, L_work)
    mx_p = jnp.concatenate([mx, zpad], axis=-1)              # (TB, L_work)

    # Hoist the 15 scalar SMEM reads out of the tap loop.
    w_avg = [w_ref[0, k] for k in range(7)]
    w_max = [w_ref[1, k] for k in range(7)]
    bias = b_ref[0]

    # Accumulate only over the stored output width (trims VALU work when the
    # working slab carries the extra +128 slack columns).
    acc = jnp.full((tb, l_out), bias, jnp.float32)
    for k in range(7):                            # static unroll: 7 taps
        # out[l] += w[:, k] * in[:, l + k - 3]
        shift = (3 - k) % l_work
        if shift == 0:
            a_k, m_k = avg_p, mx_p
        else:
            a_k = pltpu.roll(avg_p, shift=shift, axis=1)     # XLU lane rotate
            m_k = pltpu.roll(mx_p, shift=shift, axis=1)
        acc = acc + w_avg[k] * a_k[:, :l_out] + w_max[k] * m_k[:, :l_out]

    o_ref[...] = jax.nn.sigmoid(acc).astype(o_ref.dtype)


def _vmem_capacity_bytes():
    """Physical VMEM per core (generation-aware); conservative fallback."""
    try:
        info = pltpu.get_tpu_info()
        cap = getattr(info, "vmem_capacity_bytes", None)
        if cap:
            return int(cap)
    except Exception:
        pass
    return 64 << 20   # conservative: v7x per-TC VMEM


def _pick_batch_tile(n, c, l, elem_bytes, l_out, l_work, vmem_cap):
    """Batch rows per grid step, sized against the per-core VMEM capacity."""
    # Per-batch-row VMEM footprint: double-buffered input + double-buffered
    # output (input dtype) + ~6 live f32 working slabs of width L_work.
    per_row = (2 * c * l * elem_bytes
               + 2 * l_out * elem_bytes
               + 6 * l_work * 4)
    budget = int(vmem_cap * 0.6)          # leave headroom for compiler scratch
    fit = max(1, budget // per_row)
    # Keep >= 2 grid steps when the batch is non-trivial so the "parallel"
    # batch axis can shard across v7x's two TensorCores.
    if n >= 16:
        fit = min(fit, max(8, (n // 2) // 8 * 8))
    if fit >= n:
        return n                          # whole batch (block dims == array dims)
    if fit >= 8:
        return (fit // 8) * 8             # multiple of 8 -> dense sublane stores
    if n <= 8:
        return n
    # TODO(synk): for very large C*L a single 8-row block may still exceed the
    # VMEM budget; tile C as a trailing "arbitrary" grid axis with running
    # f32-sum / running-max accumulators instead of forcing 8 rows here.
    return 8


def spatial_attention(x, weight, bias):
    """x: (N, C, L). weight: (1, 2, 7). bias: (1,). Returns (N, 1, L) in x.dtype."""
    n, c, l = x.shape
    w2d = weight.reshape(2, 7).astype(jnp.float32)
    b1d = bias.reshape(1).astype(jnp.float32)

    # Stored output width: lane-dense, no extra slack columns (the +128 roll
    # slack lives only inside the kernel's working slabs).
    l_out = ((l + 127) // 128) * 128
    l_work = l_out if (l_out - l) >= 3 else l_out + 128

    # TODO(synk): for L < 128 a lane-folded layout (batch/channels into the
    # lane axis) would avoid lane-padded rows in the input DMA; not done here.

    vmem_cap = _vmem_capacity_bytes()
    tb = _pick_batch_tile(n, c, l, x.dtype.itemsize, l_out, l_work, vmem_cap)

    # Ragged last block (n % tb != 0) is handled by Pallas: loads past N read
    # garbage rows (possibly NaN) whose outputs are masked/sliced off below —
    # intentional, do NOT add a mask.  No wrapper-side jnp.pad (no HBM copy).
    grid = (n + tb - 1) // tb

    out = pl.pallas_call(
        _spatial_attention_kernel,
        out_shape=jax.ShapeDtypeStruct((n, l_out), x.dtype),
        grid_spec=pltpu.PrefetchScalarGridSpec(
            num_scalar_prefetch=0,
            grid=(grid,),
            in_specs=[
                pl.BlockSpec((tb, c, l), lambda i: (i, 0, 0)),
                pl.BlockSpec(memory_space=pltpu.MemorySpace.SMEM),
                pl.BlockSpec(memory_space=pltpu.MemorySpace.SMEM),
            ],
            out_specs=pl.BlockSpec((tb, l_out), lambda i: (i, 0)),
        ),
        compiler_params=pltpu.CompilerParams(
            dimension_semantics=("parallel",),
            vmem_limit_bytes=int(vmem_cap * 0.75),
        ),
    )(x, w2d, b1d)

    return out[:, :l][:, None, :]


def _reference(x, weight, bias):
    # Pure-JAX reference of the PyTorch forward.
    avg = jnp.mean(x, axis=1, keepdims=True)
    mx = jnp.max(x, axis=1, keepdims=True)
    out = jnp.concatenate([avg, mx], axis=1)       # (N, 2, L)
    conv = jax.lax.conv_general_dilated(
        out, weight, window_strides=(1,), padding=((3, 3),),
        dimension_numbers=("NCH", "OIH", "NCH"))
    return jax.nn.sigmoid(conv + bias[None, :, None])


if __name__ == "__main__":
    key = jax.random.PRNGKey(0)
    kx, kw, kb = jax.random.split(key, 3)

    N, C, L = 2, 4, 16
    x = jax.random.normal(kx, (N, C, L), dtype=jnp.float32)

    # Deterministic conv1d parameters (shapes from nn.Conv1d(2, 1, 7, padding=3))
    weight = jax.random.normal(kw, (1, 2, 7), dtype=jnp.float32) * 0.1
    bias = jax.random.normal(kb, (1,), dtype=jnp.float32) * 0.1

    out = spatial_attention(x, weight, bias)
    out = jax.block_until_ready(out)

    ref = _reference(x, weight, bias)
    assert out.shape == (N, 1, L)
    assert jnp.allclose(out, ref, atol=1e-5, rtol=1e-5)

    print("KERNEL_OK")
</pallas_src>

<mosaic_0001>
module attributes {stable_mosaic.version = 11 : i64} {
  func.func @_spatial_attention_kernel(%arg0: i32, %arg1: memref<2x4x16xf32, #tpu.memory_space<vmem>>, %arg2: memref<2x7xf32, #tpu.memory_space<smem>>, %arg3: memref<1xf32, #tpu.memory_space<smem>>, %arg4: memref<2x128xf32, #tpu.memory_space<vmem>>) attributes {dimension_semantics = [#tpu.dimension_semantics<parallel>], iteration_bounds = array<i64: 1>, scalar_prefetch = 0 : i64, scratch_operands = 0 : i64, tpu.core_type = #tpu.core_type<tc>, window_params = [{transform_indices = @transform_0, window_bounds = array<i64: 2, 4, 16>}, {transform_indices = @transform_1, window_bounds = array<i64: 2, 7>}, {transform_indices = @transform_2, window_bounds = array<i64: 1>}, {transform_indices = @transform_3, window_bounds = array<i64: 2, 128>}]} {
    %c0 = arith.constant 0 : index
    %c0_0 = arith.constant 0 : index
    %c0_1 = arith.constant 0 : index
    %0 = vector.load %arg1[%c0, %c0_0, %c0_1] : memref<2x4x16xf32, #tpu.memory_space<vmem>>, vector<2x4x16xf32>
    %cst = arith.constant dense<0.000000e+00> : vector<2x16xf32>
    %1 = vector.multi_reduction <add>, %0, %cst [1] : vector<2x4x16xf32> to vector<2x16xf32>
    %cst_2 = arith.constant 4.000000e+00 : f32
    %2 = vector.broadcast %cst_2 : f32 to vector<2x16xf32>
    %3 = arith.divf %1, %2 : vector<2x16xf32>
    %cst_3 = arith.constant dense<0xFF800000> : vector<2x16xf32>
    %4 = vector.multi_reduction <maximumf>, %0, %cst_3 [1] : vector<2x4x16xf32> to vector<2x16xf32>
    %cst_4 = arith.constant 0.000000e+00 : f32
    %5 = vector.broadcast %cst_4 : f32 to vector<2x112xf32>
    %6 = tpu.concatenate %3, %5 in 1 : vector<2x16xf32>, vector<2x112xf32> -> vector<2x128xf32>
    %7 = tpu.concatenate %4, %5 in 1 : vector<2x16xf32>, vector<2x112xf32> -> vector<2x128xf32>
    %c0_5 = arith.constant 0 : index
    %c0_6 = arith.constant 0 : index
    %8 = memref.load %arg2[%c0_5, %c0_6] : memref<2x7xf32, #tpu.memory_space<smem>>
    %c0_7 = arith.constant 0 : index
    %c1 = arith.constant 1 : index
    %9 = memref.load %arg2[%c0_7, %c1] : memref<2x7xf32, #tpu.memory_space<smem>>
    %c0_8 = arith.constant 0 : index
    %c2 = arith.constant 2 : index
    %10 = memref.load %arg2[%c0_8, %c2] : memref<2x7xf32, #tpu.memory_space<smem>>
    %c0_9 = arith.constant 0 : index
    %c3 = arith.constant 3 : index
    %11 = memref.load %arg2[%c0_9, %c3] : memref<2x7xf32, #tpu.memory_space<smem>>
    %c0_10 = arith.constant 0 : index
    %c4 = arith.constant 4 : index
    %12 = memref.load %arg2[%c0_10, %c4] : memref<2x7xf32, #tpu.memory_space<smem>>
    %c0_11 = arith.constant 0 : index
    %c5 = arith.constant 5 : index
    %13 = memref.load %arg2[%c0_11, %c5] : memref<2x7xf32, #tpu.memory_space<smem>>
    %c0_12 = arith.constant 0 : index
    %c6 = arith.constant 6 : index
    %14 = memref.load %arg2[%c0_12, %c6] : memref<2x7xf32, #tpu.memory_space<smem>>
    %c1_13 = arith.constant 1 : index
    %c0_14 = arith.constant 0 : index
    %15 = memref.load %arg2[%c1_13, %c0_14] : memref<2x7xf32, #tpu.memory_space<smem>>
    %c1_15 = arith.constant 1 : index
    %c1_16 = arith.constant 1 : index
    %16 = memref.load %arg2[%c1_15, %c1_16] : memref<2x7xf32, #tpu.memory_space<smem>>
    %c1_17 = arith.constant 1 : index
    %c2_18 = arith.constant 2 : index
    %17 = memref.load %arg2[%c1_17, %c2_18] : memref<2x7xf32, #tpu.memory_space<smem>>
    %c1_19 = arith.constant 1 : index
    %c3_20 = arith.constant 3 : index
    %18 = memref.load %arg2[%c1_19, %c3_20] : memref<2x7xf32, #tpu.memory_space<smem>>
    %c1_21 = arith.constant 1 : index
    %c4_22 = arith.constant 4 : index
    %19 = memref.load %arg2[%c1_21, %c4_22] : memref<2x7xf32, #tpu.memory_space<smem>>
    %c1_23 = arith.constant 1 : index
    %c5_24 = arith.constant 5 : index
    %20 = memref.load %arg2[%c1_23, %c5_24] : memref<2x7xf32, #tpu.memory_space<smem>>
    %c1_25 = arith.constant 1 : index
    %c6_26 = arith.constant 6 : index
    %21 = memref.load %arg2[%c1_25, %c6_26] : memref<2x7xf32, #tpu.memory_space<smem>>
    %c0_27 = arith.constant 0 : index
    %22 = memref.load %arg3[%c0_27] : memref<1xf32, #tpu.memory_space<smem>>
    %23 = vector.broadcast %22 : f32 to vector<2x128xf32>
    %c3_i32 = arith.constant 3 : i32
    %24 = tpu.dynamic_rotate %6 by %c3_i32 dim 1 : vector<2x128xf32>, i32 -> vector<2x128xf32>
    %c3_i32_28 = arith.constant 3 : i32
    %25 = tpu.dynamic_rotate %7 by %c3_i32_28 dim 1 : vector<2x128xf32>, i32 -> vector<2x128xf32>
    %26 = vector.broadcast %8 : f32 to vector<2x128xf32>
    %27 = arith.mulf %26, %24 : vector<2x128xf32>
    %28 = arith.addf %23, %27 : vector<2x128xf32>
    %29 = vector.broadcast %15 : f32 to vector<2x128xf32>
    %30 = arith.mulf %29, %25 : vector<2x128xf32>
    %31 = arith.addf %28, %30 : vector<2x128xf32>
    %c2_i32 = arith.constant 2 : i32
    %32 = tpu.dynamic_rotate %6 by %c2_i32 dim 1 : vector<2x128xf32>, i32 -> vector<2x128xf32>
    %c2_i32_29 = arith.constant 2 : i32
    %33 = tpu.dynamic_rotate %7 by %c2_i32_29 dim 1 : vector<2x128xf32>, i32 -> vector<2x128xf32>
    %34 = vector.broadcast %9 : f32 to vector<2x128xf32>
    %35 = arith.mulf %34, %32 : vector<2x128xf32>
    %36 = arith.addf %31, %35 : vector<2x128xf32>
    %37 = vector.broadcast %16 : f32 to vector<2x128xf32>
    %38 = arith.mulf %37, %33 : vector<2x128xf32>
    %39 = arith.addf %36, %38 : vector<2x128xf32>
    %c1_i32 = arith.constant 1 : i32
    %40 = tpu.dynamic_rotate %6 by %c1_i32 dim 1 : vector<2x128xf32>, i32 -> vector<2x128xf32>
    %c1_i32_30 = arith.constant 1 : i32
    %41 = tpu.dynamic_rotate %7 by %c1_i32_30 dim 1 : vector<2x128xf32>, i32 -> vector<2x128xf32>
    %42 = vector.broadcast %10 : f32 to vector<2x128xf32>
    %43 = arith.mulf %42, %40 : vector<2x128xf32>
    %44 = arith.addf %39, %43 : vector<2x128xf32>
    %45 = vector.broadcast %17 : f32 to vector<2x128xf32>
    %46 = arith.mulf %45, %41 : vector<2x128xf32>
    %47 = arith.addf %44, %46 : vector<2x128xf32>
    %48 = vector.broadcast %11 : f32 to vector<2x128xf32>
    %49 = arith.mulf %48, %6 : vector<2x128xf32>
    %50 = arith.addf %47, %49 : vector<2x128xf32>
    %51 = vector.broadcast %18 : f32 to vector<2x128xf32>
    %52 = arith.mulf %51, %7 : vector<2x128xf32>
    %53 = arith.addf %50, %52 : vector<2x128xf32>
    %c127_i32 = arith.constant 127 : i32
    %54 = tpu.dynamic_rotate %6 by %c127_i32 dim 1 : vector<2x128xf32>, i32 -> vector<2x128xf32>
    %c127_i32_31 = arith.constant 127 : i32
    %55 = tpu.dynamic_rotate %7 by %c127_i32_31 dim 1 : vector<2x128xf32>, i32 -> vector<2x128xf32>
    %56 = vector.broadcast %12 : f32 to vector<2x128xf32>
    %57 = arith.mulf %56, %54 : vector<2x128xf32>
    %58 = arith.addf %53, %57 : vector<2x128xf32>
    %59 = vector.broadcast %19 : f32 to vector<2x128xf32>
    %60 = arith.mulf %59, %55 : vector<2x128xf32>
    %61 = arith.addf %58, %60 : vector<2x128xf32>
    %c126_i32 = arith.constant 126 : i32
    %62 = tpu.dynamic_rotate %6 by %c126_i32 dim 1 : vector<2x128xf32>, i32 -> vector<2x128xf32>
    %c126_i32_32 = arith.constant 126 : i32
    %63 = tpu.dynamic_rotate %7 by %c126_i32_32 dim 1 : vector<2x128xf32>, i32 -> vector<2x128xf32>
    %64 = vector.broadcast %13 : f32 to vector<2x128xf32>
    %65 = arith.mulf %64, %62 : vector<2x128xf32>
    %66 = arith.addf %61, %65 : vector<2x128xf32>
    %67 = vector.broadcast %20 : f32 to vector<2x128xf32>
    %68 = arith.mulf %67, %63 : vector<2x128xf32>
    %69 = arith.addf %66, %68 : vector<2x128xf32>
    %c125_i32 = arith.constant 125 : i32
    %70 = tpu.dynamic_rotate %6 by %c125_i32 dim 1 : vector<2x128xf32>, i32 -> vector<2x128xf32>
    %c125_i32_33 = arith.constant 125 : i32
    %71 = tpu.dynamic_rotate %7 by %c125_i32_33 dim 1 : vector<2x128xf32>, i32 -> vector<2x128xf32>
    %72 = vector.broadcast %14 : f32 to vector<2x128xf32>
    %73 = arith.mulf %72, %70 : vector<2x128xf32>
    %74 = arith.addf %69, %73 : vector<2x128xf32>
    %75 = vector.broadcast %21 : f32 to vector<2x128xf32>
    %76 = arith.mulf %75, %71 : vector<2x128xf32>
    %77 = arith.addf %74, %76 : vector<2x128xf32>
    %78 = arith.negf %77 : vector<2x128xf32>
    %79 = math.exp %78 : vector<2x128xf32>
    %cst_34 = arith.constant 1.000000e+00 : f32
    %80 = vector.broadcast %cst_34 : f32 to vector<2x128xf32>
    %81 = arith.addf %80, %79 : vector<2x128xf32>
    %82 = arith.divf %80, %81 : vector<2x128xf32>
    %c0_35 = arith.constant 0 : index
    %c0_36 = arith.constant 0 : index
    %83 = vector.load %arg4[%c0_35, %c0_36] : memref<2x128xf32, #tpu.memory_space<vmem>>, vector<2x128xf32>
    tpu.vector_store %arg4[%c0_35, %c0_36], %82 {strides = array<i32>} : memref<2x128xf32, #tpu.memory_space<vmem>>, vector<2x128xf32>,
    return
  }
  func.func @transform_0(%arg0: i32) -> (i32, i32, i32) {
    %c0_i32 = arith.constant 0 : i32
    %c0_i32_0 = arith.constant 0 : i32
    %c0_i32_1 = arith.constant 0 : i32
    return %arg0, %c0_i32, %c0_i32_0 : i32, i32, i32
  }
  func.func @transform_1(%arg0: i32) -> (i32, i32) {
    %c0_i32 = arith.constant 0 : i32
    %c0_i32_0 = arith.constant 0 : i32
    %c0_i32_1 = arith.constant 0 : i32
    return %c0_i32, %c0_i32_0 : i32, i32
  }
  func.func @transform_2(%arg0: i32) -> i32 {
    %c0_i32 = arith.constant 0 : i32
    %c0_i32_0 = arith.constant 0 : i32
    return %c0_i32 : i32
  }
  func.func @transform_3(%arg0: i32) -> (i32, i32) {
    %c0_i32 = arith.constant 0 : i32
    %c0_i32_0 = arith.constant 0 : i32
    return %arg0, %c0_i32 : i32, i32
  }
}

</mosaic_0001>

<llo_original>
// kernel: tpu_custom_call.1
$region0: #{tpu_custom_call.1}
  #allocation0 [shape = 'u32[]', space=smem, size = 0x4, offset = 0x4, fixed_abs, tag = 'smem constant byte address 0x4 - core index']
  #allocation1 [shape = 'u32[72,128]{1,0:T(1,128)}', space=vmem, size = 0x9000, scoped, tag = 'internal scratch']
  #allocation2 [shape = 'f32[1]{0:T(128)S(6)}', space=smem, size = 0x200, scoped, tag = 'scoped memory for tpu_custom_call.1']
  %s0 = inlined_call_operand.hbm [shape: f32[2,4,16], index: 0, kind: input, shape index: {}]
  %s1 = inlined_call_operand.vmem [shape: f32[2,7], index: 1, kind: input, shape index: {}]
  %s2 = inlined_call_operand.<no memory space> [shape: f32[1], index: 2, kind: input, shape index: {}]
  %s3 = inlined_call_operand.hbm [shape: f32[2,128], index: 3, kind: output, shape index: {}]
  %s4 = sld [smem:[#allocation0]]
  $region30: #{tpu_custom_call.1} parent=0
    _
  %s6 = ssub.s32 1, %s4
  %s7 = scalar_select 0, %s6, %s4
  %8 = sst [smem:[#allocation2]] %s2
  $region1: #{tpu_custom_call.1} parent=0
    #allocation3 [shape = 'u8[4096]{0}', space=vmem, size = 0x1000, scoped, tag = 'input window, operand 0, single buffered']
    #allocation4 [shape = 's32[1]{0}', space=sflag, size = 0x4, scoped, tag = 'scoped memory for tpu_custom_call.1']
    #allocation5 [shape = 's32[1]{0}', space=sflag, size = 0x4, scoped, tag = 'scoped memory for tpu_custom_call.1']
    #allocation6 [shape = 's32[1]{0}', space=sflag, size = 0x4, scoped, tag = 'scoped memory for tpu_custom_call.1']
    #allocation7 [shape = 'u8[1024]{0}', space=smem, size = 0x400, scoped, tag = 'input window, operand 1, single buffered']
    #allocation8 [shape = 'u8[1024]{0}', space=vmem, size = 0x400, scoped, tag = 'output window, operand 0, single buffered']
    %9 = vsyncpa [#allocation4], 0
    %10 = vsyncpa [#allocation6], 0
    %11 = vsyncpa [#allocation5], 0
    // Predicated region
    $region2: #{tpu_custom_call.1} parent=1 // pred_check
      _
    $region3: #{tpu_custom_call.1} parent=1 // pred_check_branch
      %13 = sbr.rel (0) target = $region5
    $region4: #{tpu_custom_call.1} parent=1 // pred_region
      %15 = vsyncadd [#allocation4], 0
      %s16 = sshll.u32 %s0, 4
      %s17 = int_to_ptr.hbm [resolvable:$true] %s16
      %s18 = sshll.u32 [#allocation3], 4
      %s19 = int_to_ptr.vmem [resolvable:$true] %s18
      %24 = dma.hbm_to_vmem [thread:$0]  %s17, 128, %s19, [#allocation4], 64, 64, 4
    $region5: #{tpu_custom_call.1} parent=1 // pred_fallthru
      _
    // Predicated region
    $region6: #{tpu_custom_call.1} parent=1 // pred_check
      _
    $region7: #{tpu_custom_call.1} parent=1 // pred_check_branch
      %26 = sbr.rel (0) target = $region9
    $region8: #{tpu_custom_call.1} parent=1 // pred_region
      %28 = vsyncadd [#allocation6], 0
      %s30 = sshll.u32 %s1, 4
      %s31 = int_to_ptr.vmem [resolvable:$true] %s30
      %33 = dma.vmem_to_smem %s31, 32, [#allocation7], [#allocation6]
    $region9: #{tpu_custom_call.1} parent=1 // pred_fallthru
      _
    // Predicated region
    $region10: #{tpu_custom_call.1} parent=1 // pred_check
      _
    $region11: #{tpu_custom_call.1} parent=1 // pred_check_branch
      %35 = sbr.rel (0) target = $region13
    $region12: #{tpu_custom_call.1} parent=1 // pred_region
      _
    $region13: #{tpu_custom_call.1} parent=1 // pred_fallthru
      _
    // Predicated region
    $region14: #{tpu_custom_call.1} parent=1 // pred_check
      _
    $region15: #{tpu_custom_call.1} parent=1 // pred_check_branch
      %37 = sbr.rel (0) target = $region17
    $region16: #{tpu_custom_call.1} parent=1 // pred_region
      %39 = dma.done [#allocation4], 128
    $region17: #{tpu_custom_call.1} parent=1 // pred_fallthru
      _
    // Predicated region
    $region18: #{tpu_custom_call.1} parent=1 // pred_check
      _
    $region19: #{tpu_custom_call.1} parent=1 // pred_check_branch
      %41 = sbr.rel (0) target = $region21
    $region20: #{tpu_custom_call.1} parent=1 // pred_region
      %43 = dma.done [#allocation6], 32
    $region21: #{tpu_custom_call.1} parent=1 // pred_fallthru
      _
    %44 = sfence
    %v45 = vld [vmem:[#allocation3] sm:$0xf]
    %v46 = vld [vmem:[#allocation3 + $0x4] sm:$0xf]
    %vm47 = vcmask 125952
    %v48 = vsel %vm47, %v45, 0.0
    %v49 = vrot.slane %v48, 4
    %v50 = vadd.f32 %v48, %v49
    %v51 = vrot.slane %v50, 2
    %v52 = vadd.f32 %v50, %v51
    %v53 = vrot.slane %v52, 1
    %v54 = vadd.f32 %v52, %v53
    %v55 = vsel %vm47, %v46, 0.0
    %v56 = vrot.slane %v55, 4
    %v57 = vadd.f32 %v55, %v56
    %v58 = vrot.slane %v57, 2
    %v59 = vadd.f32 %v57, %v58
    %v60 = vrot.slane %v59, 1
    %v61 = vadd.f32 %v59, %v60
    %v62 = vrcp.pop 4.0
    %v63 = vmul.f32 4.0, %v62
    %v64 = vsub.f32 1.0, %v63
    %v65 = vmul.f32 %v62, %v64
    %v66 = vadd.f32 %v62, %v65
    %vm67 = vweird.f32 %v62
    %v68 = vsel %vm67, %v62, %v66
    %v69 = vmul.f32 %v54, %v68
    %v70 = vmul.f32 %v61, %v68
    %v71 = vsel %vm47, %v45, -inf
    %v72 = vrot.slane %v71, 4
    %v73 = vmax.f32 %v71, %v72
    %v74 = vrot.slane %v73, 2
    %v75 = vmax.f32 %v73, %v74
    %v76 = vrot.slane %v75, 1
    %v77 = vmax.f32 %v75, %v76
    %v78 = vsel %vm47, %v46, -inf
    %v79 = vrot.slane %v78, 4
    %v80 = vmax.f32 %v78, %v79
    %v81 = vrot.slane %v80, 2
    %v82 = vmax.f32 %v80, %v81
    %v83 = vrot.slane %v82, 1
    %v84 = vmax.f32 %v82, %v83
    %vm87 = vcmask 1041409
    %v88 = vsel %vm87, %v70, %v69
    %vm90 = vcmask 130048
    %v91 = vsel %vm90, %v88, 0.0
    %v94 = vsel %vm87, %v84, %v77
    %v96 = vsel %vm90, %v94, 0.0
    %s97 = sld [smem:[#allocation7]]
    %s98 = sld [smem:[#allocation7 + $0x1]]
    %s99 = sld [smem:[#allocation7 + $0x2]]
    %s100 = sld [smem:[#allocation7 + $0x3]]
    %s101 = sld [smem:[#allocation7 + $0x4]]
    %s102 = sld [smem:[#allocation7 + $0x5]]
    %s103 = sld [smem:[#allocation7 + $0x6]]
    %s104 = sld [smem:[#allocation7 + $0x80]]
    %s105 = sld [smem:[#allocation7 + $0x81]]
    %s106 = sld [smem:[#allocation7 + $0x82]]
    %s107 = sld [smem:[#allocation7 + $0x83]]
    %s108 = sld [smem:[#allocation7 + $0x84]]
    %s109 = sld [smem:[#allocation7 + $0x85]]
    %s110 = sld [smem:[#allocation7 + $0x86]]
    %s111 = sld [smem:[#allocation2]]
    %v112 = vstv %s111
    %113 = vrot.lane.b32.xlu0 %v91, 3
    %v114 = vpop.permute.xlu0 %113
    %115 = vrot.lane.b32.xlu0 %v96, 3
    %v116 = vpop.permute.xlu0 %115
    %v117 = vstv %s97
    %v118 = vmul.f32 %v117, %v114
    %v119 = vadd.f32 %v112, %v118
    %v120 = vstv %s104
    %v121 = vmul.f32 %v120, %v116
    %v122 = vadd.f32 %v119, %v121
    %123 = vrot.lane.b32.xlu0 %v91, 2
    %v124 = vpop.permute.xlu0 %123
    %125 = vrot.lane.b32.xlu0 %v96, 2
    %v126 = vpop.permute.xlu0 %125
    %v127 = vstv %s98
    %v128 = vmul.f32 %v127, %v124
    %v129 = vadd.f32 %v122, %v128
    %v130 = vstv %s105
    %v131 = vmul.f32 %v130, %v126
    %v132 = vadd.f32 %v129, %v131
    %133 = vrot.lane.b32.xlu0 %v91, 1
    %v134 = vpop.permute.xlu0 %133
    %135 = vrot.lane.b32.xlu0 %v96, 1
    %v136 = vpop.permute.xlu0 %135
    %v137 = vstv %s99
    %v138 = vmul.f32 %v137, %v134
    %v139 = vadd.f32 %v132, %v138
    %v140 = vstv %s106
    %v141 = vmul.f32 %v140, %v136
    %v142 = vadd.f32 %v139, %v141
    %v143 = vstv %s100
    %v144 = vmul.f32 %v143, %v91
    %v145 = vadd.f32 %v142, %v144
    %v146 = vstv %s107
    %v147 = vmul.f32 %v146, %v96
    %v148 = vadd.f32 %v145, %v147
    %149 = vrot.lane.b32.xlu0 %v91, 127
    %v150 = vpop.permute.xlu0 %149
    %151 = vrot.lane.b32.xlu0 %v96, 127
    %v152 = vpop.permute.xlu0 %151
    %v153 = vstv %s101
    %v154 = vmul.f32 %v153, %v150
    %v155 = vadd.f32 %v148, %v154
    %v156 = vstv %s108
    %v157 = vmul.f32 %v156, %v152
    %v158 = vadd.f32 %v155, %v157
    %159 = vrot.lane.b32.xlu0 %v91, 126
    %v160 = vpop.permute.xlu0 %159
    %161 = vrot.lane.b32.xlu0 %v96, 126
    %v162 = vpop.permute.xlu0 %161
    %v163 = vstv %s102
    %v164 = vmul.f32 %v163, %v160
    %v165 = vadd.f32 %v158, %v164
    %v166 = vstv %s109
    %v167 = vmul.f32 %v166, %v162
    %v168 = vadd.f32 %v165, %v167
    %169 = vrot.lane.b32.xlu0 %v91, 125
    %v170 = vpop.permute.xlu0 %169
    %171 = vrot.lane.b32.xlu0 %v96, 125
    %v172 = vpop.permute.xlu0 %171
    %v173 = vstv %s103
    %v174 = vmul.f32 %v173, %v170
    %v175 = vadd.f32 %v168, %v174
    %v176 = vstv %s110
    %v177 = vmul.f32 %v176, %v172
    %v178 = vadd.f32 %v175, %v177
    %v179 = vxor.u32 %v178, 2147483648
    %v180 = vmul.f32 %v179, 1.442695
    %v181 = vpow.pop %v180
    %v182 = vadd.f32 %v181, 1.0
    %v183 = vrcp.pop %v182
    %v184 = vmul.f32 %v182, %v183
    %v185 = vsub.f32 1.0, %v184
    %v186 = vmul.f32 %v183, %v185
    %v187 = vadd.f32 %v183, %v186
    %vm188 = vweird.f32 %v182
    %vm189 = vweird.f32 %v183
    %vm190 = vmor %vm188, %vm189
    %v191 = vsel %vm190, %v183, %v187
    %v192 = vand.u32 2147483647, %v182
    %vm193 = vcmp.eq.f32.partialorder %v192, 8.507059e+37
    %v194 = vand.u32 %v182, 2147483648
    %v195 = vor.u32 1.1754944e-38, %v194
    %v196 = vsel %vm193, %v195, %v191
    %v197 = vmul.f32 1.0, %v196
    %198 = vst [vmem:[#allocation8] sm:$0x3] %v197
    // Predicated region
    $region22: #{tpu_custom_call.1} parent=1 // pred_check
      _
    $region23: #{tpu_custom_call.1} parent=1 // pred_check_branch
      %200 = sbr.rel (0) target = $region25
    $region24: #{tpu_custom_call.1} parent=1 // pred_region
      %202 = vsyncadd [#allocation5], 0
      %s204 = sshll.u32 [#allocation8], 4
      %s205 = int_to_ptr.vmem [resolvable:$true] %s204
      %s206 = sshll.u32 %s3, 4
      %s207 = int_to_ptr.hbm [resolvable:$true] %s206
      %209 = dma.vmem_to_hbm [thread:$0]  %s205, 32, %s207, [#allocation5]
    $region25: #{tpu_custom_call.1} parent=1 // pred_fallthru
      _
    // Predicated region
    $region26: #{tpu_custom_call.1} parent=1 // pred_check
      _
    $region27: #{tpu_custom_call.1} parent=1 // pred_check_branch
      %211 = sbr.rel (0) target = $region29
    $region28: #{tpu_custom_call.1} parent=1 // pred_region
      %213 = dma.done [#allocation5], 32
    $region29: #{tpu_custom_call.1} parent=1 // pred_fallthru
      _
    %214 = vsyncpa [#allocation4], 1
    %215 = vsyncpa [#allocation5], 1
    %216 = vsyncpa [#allocation6], 1

</llo_original>
